<compile_context>
chip_gen: v6e
topology: v6e:2x2x1
jax: 0.10.0
libtpu: 0.0.40
codegen_flags: <defaults>
</compile_context>

<pallas_src>
import functools

import numpy as np
import jax
import jax.numpy as jnp
from jax import lax
from jax.experimental import pallas as pl
from jax.experimental.pallas import tpu as pltpu


# --------------------------------------------------------------------------------------
# Tile-size helpers (keep tiles (8,128)-legal, MXU-friendly, and well under VMEM limits)
# --------------------------------------------------------------------------------------
def _pick_tile(dim, pref, align):
    """Largest multiple of `align` <= pref that divides dim; else the full dim."""
    if dim <= pref:
        return dim
    start = pref - (pref % align)
    for t in range(start, align - 1, -align):
        if dim % t == 0:
            return t
    return dim


def _pick_m_tile(M, pref=512):
    t = _pick_tile(M, pref, 128)
    if t == M and M > pref:
        t = _pick_tile(M, pref, 8)
    return t


def _pick_k_tile(K, pref=512):
    """Prefer >=2 K steps (128-multiple tiles) so DMA overlaps compute."""
    if K <= 128:
        return K
    best = None
    t = 128
    while t <= min(pref, K // 2):
        if K % t == 0:
            best = t
        t += 128
    return best if best is not None else _pick_tile(K, pref, 128)


# --------------------------------------------------------------------------------------
# Pallas kernel 1: M/N/K-tiled fused matmul  y = relu?(x @ w + bias)
#   bf16 MXU inputs, f32 accumulation directly in the resident output block (no acc
#   scratch); bias + optional ReLU applied on the last K step.  Used for every
#   BN-folded 1x1 conv in the ResNet-50 backbone.
# --------------------------------------------------------------------------------------
def _fused_matmul_kernel(x_ref, w_ref, b_ref, o_ref, *, apply_relu):
    k = pl.program_id(2)

    @pl.when(k == 0)
    def _():
        o_ref[...] = jnp.zeros_like(o_ref)

    o_ref[...] += jnp.dot(x_ref[...], w_ref[...], preferred_element_type=jnp.float32)

    @pl.when(k == pl.num_programs(2) - 1)
    def _():
        r = o_ref[...] + b_ref[...]
        if apply_relu:
            r = jnp.maximum(r, 0.0)
        o_ref[...] = r


@functools.lru_cache(maxsize=None)
def _make_fused_matmul(M, K, N, bm, bn, bk, apply_relu):
    kernel = functools.partial(_fused_matmul_kernel, apply_relu=apply_relu)
    call = pl.pallas_call(
        kernel,
        out_shape=jax.ShapeDtypeStruct((M, N), jnp.float32),
        grid_spec=pltpu.PrefetchScalarGridSpec(
            num_scalar_prefetch=0,
            grid=(M // bm, N // bn, K // bk),          # K (reduction) axis last
            in_specs=[
                pl.BlockSpec((bm, bk), lambda i, j, k: (i, k)),
                pl.BlockSpec((bk, bn), lambda i, j, k: (k, j)),
                pl.BlockSpec((1, bn), lambda i, j, k: (0, j)),
            ],
            out_specs=pl.BlockSpec((bm, bn), lambda i, j, k: (i, j)),
        ),
        compiler_params=pltpu.CompilerParams(
            dimension_semantics=("parallel", "parallel", "arbitrary"),
            vmem_limit_bytes=32 * 1024 * 1024,   # tiles are ~5 MiB; safe on v5e/v6e/v7x
        ),
    )
    return jax.jit(call)


def fused_matmul(x, w, bias=None, apply_relu=False):
    """relu?(x @ w + bias).  x:(M,K) w:(K,N) f32 in; bf16 on the MXU, f32 out."""
    M, K = x.shape
    K2, N = w.shape
    assert K == K2
    if bias is None:
        bias = jnp.zeros((N,), jnp.float32)
    Mp = ((M + 7) // 8) * 8                      # keep M tiles sublane-aligned
    if Mp != M:
        x = jnp.pad(x, ((0, Mp - M), (0, 0)))
    bm = _pick_m_tile(Mp)
    bn = _pick_tile(N, 512, 128)
    bk = _pick_k_tile(K)
    out = _make_fused_matmul(Mp, K, N, bm, bn, bk, bool(apply_relu))(
        x.astype(jnp.bfloat16),
        w.astype(jnp.bfloat16),
        bias.reshape(1, N).astype(jnp.float32),
    )
    return out[:M] if Mp != M else out


# --------------------------------------------------------------------------------------
# Pallas kernel 2: fused UprightClassifier6D head
#   features(B, 6144) -> Linear(6144,1000) -> [Dropout=id] -> ReLU -> Linear(1000,6)
#   -> Tanh -> Gram-Schmidt -> cross -> (B, 9) (reshaped to (B,3,3) outside)
#   Batch rows are padded to a full sublane (>=8) before the call.
# --------------------------------------------------------------------------------------
def _head_kernel(f_ref, w1_ref, b1_ref, w2_ref, b2_ref, o_ref, acc_ref):
    k = pl.program_id(0)

    @pl.when(k == 0)
    def _():
        acc_ref[...] = jnp.zeros_like(acc_ref)

    acc_ref[...] += jnp.dot(f_ref[...], w1_ref[...], preferred_element_type=jnp.float32)

    @pl.when(k == pl.num_programs(0) - 1)
    def _():
        h = jnp.maximum(acc_ref[...] + b1_ref[...], 0.0)          # Linear1 + Dropout(id) + ReLU
        d6 = jnp.tanh(
            jnp.dot(h, w2_ref[...], preferred_element_type=jnp.float32) + b2_ref[...]
        )                                                         # Linear2 + Tanh, (B, 6)
        a1 = d6[:, 0:3]
        a2 = d6[:, 3:6]
        eps = 1e-12
        n1 = jnp.sqrt(jnp.sum(a1 * a1, axis=-1, keepdims=True))
        b1v = a1 / jnp.maximum(n1, eps)                           # F.normalize(a1)
        proj = jnp.sum(b1v * a2, axis=-1, keepdims=True)
        u2 = a2 - proj * b1v
        n2 = jnp.sqrt(jnp.sum(u2 * u2, axis=-1, keepdims=True))
        b2v = u2 / jnp.maximum(n2, eps)                           # F.normalize(b2)
        c0 = b1v[:, 1:2] * b2v[:, 2:3] - b1v[:, 2:3] * b2v[:, 1:2]
        c1 = b1v[:, 2:3] * b2v[:, 0:1] - b1v[:, 0:1] * b2v[:, 2:3]
        c2 = b1v[:, 0:1] * b2v[:, 1:2] - b1v[:, 1:2] * b2v[:, 0:1]
        b3v = jnp.concatenate([c0, c1, c2], axis=-1)              # cross(b1, b2)
        o_ref[...] = jnp.concatenate([b1v, b2v, b3v], axis=-1)    # rows b1|b2|b3 -> (B, 9)


def head_forward(features, w1, b1, w2, b2, block_k=512):
    B, K = features.shape
    Hd = w1.shape[1]
    Bp = max(8, ((B + 7) // 8) * 8)              # pad batch rows to a full sublane
    if Bp != B:
        features = jnp.pad(features, ((0, Bp - B), (0, 0)))
    bk = block_k if (K % block_k == 0) else K
    grid = (K // bk,)
    out = pl.pallas_call(
        _head_kernel,
        out_shape=jax.ShapeDtypeStruct((Bp, 9), jnp.float32),
        grid_spec=pltpu.PrefetchScalarGridSpec(
            num_scalar_prefetch=0,
            grid=grid,
            in_specs=[
                pl.BlockSpec((Bp, bk), lambda k: (0, k)),
                pl.BlockSpec((bk, Hd), lambda k: (k, 0)),
                pl.BlockSpec((1, Hd), lambda k: (0, 0)),
                pl.BlockSpec((Hd, 6), lambda k: (0, 0)),
                pl.BlockSpec((1, 6), lambda k: (0, 0)),
            ],
            out_specs=pl.BlockSpec((Bp, 9), lambda k: (0, 0)),
            scratch_shapes=[pltpu.VMEM((Bp, Hd), jnp.float32)],
        ),
        compiler_params=pltpu.CompilerParams(
            dimension_semantics=("arbitrary",),
            vmem_limit_bytes=32 * 1024 * 1024,
        ),
    )(features, w1, b1.reshape(1, -1), w2, b2.reshape(1, -1))
    # == torch.stack((b1, b2, b3), dim=-2)
    return out[:B].reshape(B, 3, 3)


# --------------------------------------------------------------------------------------
# ResNet-50 backbone (fc = Identity), NHWC, eval-mode BatchNorm. Glue in plain JAX;
# every 1x1 conv (+folded BN, + bias/ReLU epilogue) goes through the Pallas matmul.
# --------------------------------------------------------------------------------------
LAYER_CFG = [(64, 3, 1), (128, 4, 2), (256, 6, 2), (512, 3, 2)]


def relu(x):
    return jnp.maximum(x, 0.0)


def batchnorm(x, bn):
    return (x - bn["mean"]) * (bn["gamma"] / jnp.sqrt(bn["var"] + 1e-5)) + bn["beta"]


def conv2d(x, w, stride, padding):
    return lax.conv_general_dilated(
        x, w,
        window_strides=(stride, stride),
        padding=((padding, padding), (padding, padding)),
        dimension_numbers=("NHWC", "HWIO", "NHWC"),
    )


def conv1x1_bn(x, w, bn, stride=1, apply_relu=True):
    # 1x1 conv + eval-mode BN (+ optional ReLU) as one fused Pallas matmul:
    #   scale = gamma/sqrt(var+eps); w' = w*scale; bias' = beta - mean*scale
    if stride != 1:
        x = x[:, ::stride, ::stride, :]
    scale = bn["gamma"] / jnp.sqrt(bn["var"] + 1e-5)
    bias = bn["beta"] - bn["mean"] * scale
    wf = w * scale[None, :]
    B, H, W, C = x.shape
    y = fused_matmul(x.reshape(B * H * W, C), wf, bias, apply_relu=apply_relu)
    return y.reshape(B, H, W, w.shape[1])


def maxpool_3x3_s2(x):
    return lax.reduce_window(
        x, jnp.array(-jnp.inf, x.dtype), lax.max,
        window_dimensions=(1, 3, 3, 1),
        window_strides=(1, 2, 2, 1),
        padding=((0, 0), (1, 1), (1, 1), (0, 0)),
    )


def make_resnet50_params(key):
    keys = iter(jax.random.split(key, 64))

    def conv_w(kh, kw, cin, cout):
        std = (1.0 / (kh * kw * cin)) ** 0.5
        return jax.random.normal(next(keys), (kh, kw, cin, cout), jnp.float32) * std

    def bn_p(c):
        return {
            "gamma": jnp.ones((c,), jnp.float32),
            "beta": jnp.zeros((c,), jnp.float32),
            "mean": jnp.zeros((c,), jnp.float32),
            "var": jnp.ones((c,), jnp.float32),
        }

    params = {"stem_w": conv_w(7, 7, 3, 64), "stem_bn": bn_p(64), "layers": []}
    inplanes = 64
    for planes, blocks, stride in LAYER_CFG:
        blist = []
        for b in range(blocks):
            s = stride if b == 0 else 1
            blk = {
                "stride": s,
                "w1": conv_w(1, 1, inplanes, planes).reshape(inplanes, planes),
                "bn1": bn_p(planes),
                "w2": conv_w(3, 3, planes, planes),
                "bn2": bn_p(planes),
                "w3": conv_w(1, 1, planes, planes * 4).reshape(planes, planes * 4),
                "bn3": bn_p(planes * 4),
            }
            if s != 1 or inplanes != planes * 4:
                blk["wd"] = conv_w(1, 1, inplanes, planes * 4).reshape(inplanes, planes * 4)
                blk["bnd"] = bn_p(planes * 4)
            blist.append(blk)
            inplanes = planes * 4
        params["layers"].append(blist)
    return params


def bottleneck(x, p):
    identity = x
    out = conv1x1_bn(x, p["w1"], p["bn1"], apply_relu=True)           # conv1+bn1+relu fused
    out = relu(batchnorm(conv2d(out, p["w2"], p["stride"], 1), p["bn2"]))
    out = conv1x1_bn(out, p["w3"], p["bn3"], apply_relu=False)        # conv3+bn3 fused
    if "wd" in p:
        identity = conv1x1_bn(x, p["wd"], p["bnd"], stride=p["stride"], apply_relu=False)
    return relu(out + identity)


def resnet50_features(x_nchw, params):
    x = jnp.transpose(x_nchw, (0, 2, 3, 1))  # NCHW -> NHWC
    x = relu(batchnorm(conv2d(x, params["stem_w"], 2, 3), params["stem_bn"]))
    x = maxpool_3x3_s2(x)
    for blist in params["layers"]:
        for p in blist:
            x = bottleneck(x, p)
    return jnp.mean(x, axis=(1, 2))  # adaptive avg pool (1,1) + flatten -> (B, 2048)


def upright6d_forward(x, bb_params, head_params):
    # x: (B, n_views=3, 3, H, W) -- PyTorch NCHW per view.  All views are batched into
    # a single backbone pass (3x fewer weight DMAs, 3x larger matmul M).
    B, V = x.shape[0], x.shape[1]
    xb = x.reshape((B * V,) + x.shape[2:])          # row b*V+i == (batch b, view i)
    feats = resnet50_features(xb, bb_params)        # (B*V, 2048)
    f = feats.reshape(B, V * 2048)                  # == torch.cat(features, 1)
    return head_forward(f, *head_params), f


# --------------------------------------------------------------------------------------
# Reference (numpy float64) for the head, used to validate the fused Pallas kernel.
# --------------------------------------------------------------------------------------
def head_ref_np(f, w1, b1, w2, b2):
    f, w1, b1, w2, b2 = [np.asarray(a, np.float64) for a in (f, w1, b1, w2, b2)]
    h = np.maximum(f @ w1 + b1, 0.0)
    d6 = np.tanh(h @ w2 + b2)
    a1, a2 = d6[:, :3], d6[:, 3:]
    b1v = a1 / np.maximum(np.linalg.norm(a1, axis=-1, keepdims=True), 1e-12)
    u2 = a2 - np.sum(b1v * a2, axis=-1, keepdims=True) * b1v
    b2v = u2 / np.maximum(np.linalg.norm(u2, axis=-1, keepdims=True), 1e-12)
    b3v = np.cross(b1v, b2v)
    return np.stack([b1v, b2v, b3v], axis=-2)


if __name__ == "__main__":
    key = jax.random.PRNGKey(0)
    k_in, k_bb, k_w1, k_b1, k_w2, k_b2, k_ta, k_tb = jax.random.split(key, 8)

    # Small but structurally faithful input: (batch, n_views, C, H, W)
    B, n_views, C, Hs, Ws = 2, 3, 3, 64, 64
    x = jax.random.normal(k_in, (B, n_views, C, Hs, Ws), jnp.float32)

    bb_params = make_resnet50_params(k_bb)

    n = 3
    w1 = jax.random.normal(k_w1, (n * 2048, 1000), jnp.float32) / np.sqrt(n * 2048)
    b1 = 0.01 * jax.random.normal(k_b1, (1000,), jnp.float32)
    w2 = 0.1 * jax.random.normal(k_w2, (1000, 6), jnp.float32) / np.sqrt(1000)
    b2 = 0.01 * jax.random.normal(k_b2, (6,), jnp.float32)
    head_params = (w1, b1, w2, b2)

    # Sanity-check the fused Pallas matmul (bf16 MXU inputs, f32 accumulation).
    ta = jax.random.normal(k_ta, (64, 256), jnp.float32)
    tb = jax.random.normal(k_tb, (256, 128), jnp.float32)
    mm = jax.block_until_ready(fused_matmul(ta, tb))
    ta_b = np.asarray(ta.astype(jnp.bfloat16).astype(jnp.float32), np.float64)
    tb_b = np.asarray(tb.astype(jnp.bfloat16).astype(jnp.float32), np.float64)
    np.testing.assert_allclose(np.asarray(mm), ta_b @ tb_b, rtol=1e-3, atol=1e-3)

    # Full forward.
    out, feats = upright6d_forward(x, bb_params, head_params)
    out = jax.block_until_ready(out)
    assert out.shape == (B, 3, 3) and out.dtype == jnp.float32
    assert np.all(np.isfinite(np.asarray(out)))

    # Validate the fused head kernel against a float64 numpy reference.
    ref = head_ref_np(feats, w1, b1, w2, b2)
    np.testing.assert_allclose(np.asarray(out), ref, rtol=1e-2, atol=1e-2)

    print("KERNEL_OK")
</pallas_src>

<mosaic_0001>
module attributes {stable_mosaic.version = 11 : i64} {
  func.func @_fused_matmul_kernel(%arg0: i32, %arg1: i32, %arg2: i32, %arg3: memref<64x128xbf16, #tpu.memory_space<vmem>>, %arg4: memref<128x128xbf16, #tpu.memory_space<vmem>>, %arg5: memref<1x128xf32, #tpu.memory_space<vmem>>, %arg6: memref<64x128xf32, #tpu.memory_space<vmem>>) attributes {dimension_semantics = [#tpu.dimension_semantics<parallel>, #tpu.dimension_semantics<parallel>, #tpu.dimension_semantics<arbitrary>], iteration_bounds = array<i64: 1, 1, 2>, scalar_prefetch = 0 : i64, scratch_operands = 0 : i64, tpu.core_type = #tpu.core_type<tc>, window_params = [{transform_indices = @transform_0, window_bounds = array<i64: 64, 128>}, {transform_indices = @transform_1, window_bounds = array<i64: 128, 128>}, {transform_indices = @transform_2, window_bounds = array<i64: 1, 128>}, {transform_indices = @transform_3, window_bounds = array<i64: 64, 128>}]} {
    %c0_i32 = arith.constant 0 : i32
    %0 = arith.cmpi eq, %arg2, %c0_i32 : i32
    %1 = arith.extui %0 : i1 to i32
    %c0_i32_0 = arith.constant 0 : i32
    %2 = arith.cmpi ne, %1, %c0_i32_0 : i32
    scf.if %2 {
      %cst_9 = arith.constant 0.000000e+00 : f32
      %12 = vector.broadcast %cst_9 : f32 to vector<64x128xf32>
      %c0_10 = arith.constant 0 : index
      %c0_11 = arith.constant 0 : index
      %13 = vector.load %arg6[%c0_10, %c0_11] : memref<64x128xf32, #tpu.memory_space<vmem>>, vector<64x128xf32>
      tpu.vector_store %arg6[%c0_10, %c0_11], %12 {strides = array<i32>} : memref<64x128xf32, #tpu.memory_space<vmem>>, vector<64x128xf32>,
    } else {
    }
    %c0 = arith.constant 0 : index
    %c0_1 = arith.constant 0 : index
    %3 = vector.load %arg6[%c0, %c0_1] : memref<64x128xf32, #tpu.memory_space<vmem>>, vector<64x128xf32>
    %c0_2 = arith.constant 0 : index
    %c0_3 = arith.constant 0 : index
    %4 = vector.load %arg3[%c0_2, %c0_3] : memref<64x128xbf16, #tpu.memory_space<vmem>>, vector<64x128xbf16>
    %c0_4 = arith.constant 0 : index
    %c0_5 = arith.constant 0 : index
    %5 = vector.load %arg4[%c0_4, %c0_5] : memref<128x128xbf16, #tpu.memory_space<vmem>>, vector<128x128xbf16>
    %cst = arith.constant dense<0.000000e+00> : vector<64x128xf32>
    %6 = tpu.matmul %4, %5, %cst {dimension_numbers = #tpu.dot_dimension_numbers<[1], [0], [0], [1], [0, 0, 1, 1], [], []>} : vector<64x128xbf16>, vector<128x128xbf16>, vector<64x128xf32> -> vector<64x128xf32>
    %7 = arith.addf %3, %6 : vector<64x128xf32>
    %c0_6 = arith.constant 0 : index
    %c0_7 = arith.constant 0 : index
    %8 = vector.load %arg6[%c0_6, %c0_7] : memref<64x128xf32, #tpu.memory_space<vmem>>, vector<64x128xf32>
    tpu.vector_store %arg6[%c0_6, %c0_7], %7 {strides = array<i32>} : memref<64x128xf32, #tpu.memory_space<vmem>>, vector<64x128xf32>,
    %c1_i32 = arith.constant 1 : i32
    %9 = arith.cmpi eq, %arg2, %c1_i32 : i32
    %10 = arith.extui %9 : i1 to i32
    %c0_i32_8 = arith.constant 0 : i32
    %11 = arith.cmpi ne, %10, %c0_i32_8 : i32
    scf.if %11 {
      %c0_9 = arith.constant 0 : index
      %c0_10 = arith.constant 0 : index
      %12 = vector.load %arg6[%c0_9, %c0_10] : memref<64x128xf32, #tpu.memory_space<vmem>>, vector<64x128xf32>
      %c0_11 = arith.constant 0 : index
      %c0_12 = arith.constant 0 : index
      %13 = vector.load %arg5[%c0_11, %c0_12] : memref<1x128xf32, #tpu.memory_space<vmem>>, vector<1x128xf32>
      %14 = vector.broadcast %13 : vector<1x128xf32> to vector<64x128xf32>
      %15 = arith.addf %12, %14 : vector<64x128xf32>
      %c0_13 = arith.constant 0 : index
      %c0_14 = arith.constant 0 : index
      %16 = vector.load %arg6[%c0_13, %c0_14] : memref<64x128xf32, #tpu.memory_space<vmem>>, vector<64x128xf32>
      tpu.vector_store %arg6[%c0_13, %c0_14], %15 {strides = array<i32>} : memref<64x128xf32, #tpu.memory_space<vmem>>, vector<64x128xf32>,
    } else {
    }
    return
  }
  func.func @transform_0(%arg0: i32, %arg1: i32, %arg2: i32) -> (i32, i32) {
    %c0_i32 = arith.constant 0 : i32
    return %arg0, %arg2 : i32, i32
  }
  func.func @transform_1(%arg0: i32, %arg1: i32, %arg2: i32) -> (i32, i32) {
    %c0_i32 = arith.constant 0 : i32
    return %arg2, %arg1 : i32, i32
  }
  func.func @transform_2(%arg0: i32, %arg1: i32, %arg2: i32) -> (i32, i32) {
    %c0_i32 = arith.constant 0 : i32
    %c0_i32_0 = arith.constant 0 : i32
    return %c0_i32, %arg1 : i32, i32
  }
  func.func @transform_3(%arg0: i32, %arg1: i32, %arg2: i32) -> (i32, i32) {
    %c0_i32 = arith.constant 0 : i32
    return %arg0, %arg1 : i32, i32
  }
}

</mosaic_0001>

<llo_original>
// kernel: tpu_custom_call.1
$region0: #{tpu_custom_call.1}
  #allocation0 [shape = 'u32[]', space=smem, size = 0x4, offset = 0x4, fixed_abs, tag = 'smem constant byte address 0x4 - core index']
  #allocation1 [shape = 'u32[144,128]{1,0:T(1,128)}', space=vmem, size = 0x12000, scoped, tag = 'internal scratch']
  %s0 = inlined_call_operand.hbm [shape: bf16[64,256], index: 0, kind: input, shape index: {}]
  %s1 = inlined_call_operand.hbm [shape: bf16[256,128], index: 1, kind: input, shape index: {}]
  %s2 = inlined_call_operand.vmem [shape: f32[1,128], index: 2, kind: input, shape index: {}]
  %s3 = inlined_call_operand.hbm [shape: f32[64,128], index: 3, kind: output, shape index: {}]
  %s4 = sld [smem:[#allocation0]]
  $region61: #{tpu_custom_call.1} parent=0
    _
  %s6 = ssub.s32 1, %s4
  %s7 = scalar_select 0, %s6, %s4
  $region1: #{tpu_custom_call.1} parent=0
    #allocation2 [shape = 'u8[32768]{0}', space=vmem, size = 0x8000, scoped, tag = 'input window, operand 0']
    #allocation3 [shape = 's32[2]{0}', space=sflag, size = 0x8, scoped, tag = 'scoped memory for tpu_custom_call.1']
    #allocation4 [shape = 's32[2]{0}', space=sflag, size = 0x8, scoped, tag = 'scoped memory for tpu_custom_call.1']
    #allocation5 [shape = 'u8[65536]{0}', space=vmem, size = 0x10000, scoped, tag = 'input window, operand 1']
    #allocation6 [shape = 's32[2]{0}', space=sflag, size = 0x8, scoped, tag = 'scoped memory for tpu_custom_call.1']
    #allocation7 [shape = 'u8[32768]{0}', space=vmem, size = 0x8000, scoped, tag = 'output window, operand 0, single buffered']
    %8 = vsyncpa [#allocation3], 0
    %s9 = scalar_lea.sflag [#allocation3], 1
    %10 = vsyncpa %s9, 0
    %11 = vsyncpa [#allocation6], 0
    %s12 = scalar_lea.sflag [#allocation6], 1
    %13 = vsyncpa %s12, 0
    %14 = vsyncpa [#allocation4], 0
    loop: start=0, step=1, limit=4
    $region2: #{tpu_custom_call.1} parent=1 // loop_pre_header
      _
    $region3: #{tpu_custom_call.1} parent=1 // loop_header
      %s16 = sphi 0, %s20
      %p17 = scmp.ge.s32.totalorder %s16, 4
      %s23 = sphi 0, %s42
      %s24 = sphi 0, %s38
      %s25 = sphi 0, %s34
      %s26 = sphi 0, %s23
      %s27 = sphi 0, %s24
      %s28 = sphi 0, %s25
      %s29 = sphi 0, %s26
      %s30 = sphi 0, %s27
      %s31 = sphi 0, %s28
      %s47 = sphi 0, %s49
      %s50 = sphi 0, %s47
      %s51 = sphi 0, %s50
      %s67 = sphi 0, %s51
      %s75 = sphi 0, %s77
      %s78 = sphi 0, %s75
      %s79 = sphi 0, %s78
      %s95 = sphi 0, %s79
      %s101 = sphi 0, %s103
      %s104 = sphi 0, %s101
      %s105 = sphi 0, %s104
      %s121 = sphi 0, %s105
      %s129 = sphi 0, %s131
      %s132 = sphi 0, %s129
      %s133 = sphi 0, %s132
      %s149 = sphi 0, %s133
    $region4: #{tpu_custom_call.1} parent=1 // loop_header_branch
      %19 = sbr.rel (%p17) target = $region8
    $region5: #{tpu_custom_call.1} parent=1 // loop_body
      %s21 = ssub.s32 %s16, 1
      %s22 = ssub.s32 %s16, 2
      %s32 = sadd.s32 1, %s25
      %p33 = scmp.ge.s32.totalorder %s32, 2
      %s34 = scalar_select %p33, 0, %s32
      %s35 = sadd.s32 1, %s24
      %s36 = scalar_select %p33, %s35, %s24
      %p37 = scmp.ge.s32.totalorder %s36, 1
      %s38 = scalar_select %p37, 0, %s36
      %s39 = sadd.s32 1, %s23
      %s40 = scalar_select %p37, %s39, %s23
      %p41 = scmp.ge.s32.totalorder %s40, 1
      %s42 = scalar_select %p41, 0, %s40
      %s43 = ssub.s32 %s23, %s42
      %s44 = ssub.s32 %s25, %s34
      %s45 = sor.u32 %s43, %s44
      %p46 = scmp.eq.s32.totalorder %s45, 0
      %s48 = sadd.s32 %s47, 1
      %s49 = scalar_select %p46, %s47, %s48
      %p52 = pneg %p46
      %p53 = scmp.eq.s32.totalorder %s16, 1
      %p54 = por %p52, %p53
      %p55 = scmp.ne.s32.totalorder %s47, %s50
      %p56 = scmp.eq.s32.totalorder %s16, 0
      %p57 = por %p55, %p56
      %p58 = scmp.ne.s32.totalorder %s47, %s50
      %p59 = scmp.eq.s32.totalorder %s21, 1
      %p60 = por %p58, %p59
      %p61 = scmp.ne.s32.totalorder %s50, %s51
      %p62 = scmp.eq.s32.totalorder %s21, 0
      %p63 = por %p61, %p62
      %p64 = scmp.ne.s32.totalorder %s50, %s51
      %p65 = scmp.eq.s32.totalorder %s22, 1
      %p66 = por %p64, %p65
      %p68 = scmp.ne.s32.totalorder %s51, %s67
      %p69 = scmp.eq.s32.totalorder %s22, 0
      %p70 = por %p68, %p69
      %s71 = ssub.s32 %s25, %s34
      %s72 = ssub.s32 %s24, %s38
      %s73 = sor.u32 %s71, %s72
      %p74 = scmp.eq.s32.totalorder %s73, 0
      %s76 = sadd.s32 %s75, 1
      %s77 = scalar_select %p74, %s75, %s76
      %p80 = pneg %p74
      %p81 = scmp.eq.s32.totalorder %s16, 1
      %p82 = por %p80, %p81
      %p83 = scmp.ne.s32.totalorder %s75, %s78
      %p84 = scmp.eq.s32.totalorder %s16, 0
      %p85 = por %p83, %p84
      %p86 = scmp.ne.s32.totalorder %s75, %s78
      %p87 = scmp.eq.s32.totalorder %s21, 1
      %p88 = por %p86, %p87
      %p89 = scmp.ne.s32.totalorder %s78, %s79
      %p90 = scmp.eq.s32.totalorder %s21, 0
      %p91 = por %p89, %p90
      %p92 = scmp.ne.s32.totalorder %s78, %s79
      %p93 = scmp.eq.s32.totalorder %s22, 1
      %p94 = por %p92, %p93
      %p96 = scmp.ne.s32.totalorder %s79, %s95
      %p97 = scmp.eq.s32.totalorder %s22, 0
      %p98 = por %p96, %p97
      %s99 = ssub.s32 %s24, %s38
      %p100 = scmp.eq.s32.totalorder %s99, 0
      %s102 = sadd.s32 %s101, 1
      %s103 = scalar_select %p100, %s101, %s102
      %p106 = pneg %p100
      %p107 = scmp.eq.s32.totalorder %s16, 1
      %p108 = por %p106, %p107
      %p109 = scmp.ne.s32.totalorder %s101, %s104
      %p110 = scmp.eq.s32.totalorder %s16, 0
      %p111 = por %p109, %p110
      %p112 = scmp.ne.s32.totalorder %s101, %s104
      %p113 = scmp.eq.s32.totalorder %s21, 1
      %p114 = por %p112, %p113
      %p115 = scmp.ne.s32.totalorder %s104, %s105
      %p116 = scmp.eq.s32.totalorder %s21, 0
      %p117 = por %p115, %p116
      %p118 = scmp.ne.s32.totalorder %s104, %s105
      %p119 = scmp.eq.s32.totalorder %s22, 1
      %p120 = por %p118, %p119
      %p122 = scmp.ne.s32.totalorder %s105, %s121
      %p123 = scmp.eq.s32.totalorder %s22, 0
      %p124 = por %p122, %p123
      %s125 = ssub.s32 %s23, %s42
      %s126 = ssub.s32 %s24, %s38
      %s127 = sor.u32 %s125, %s126
      %p128 = scmp.eq.s32.totalorder %s127, 0
      %s130 = sadd.s32 %s129, 1
      %s131 = scalar_select %p128, %s129, %s130
      %p134 = pneg %p128
      %p135 = scmp.eq.s32.totalorder %s16, 1
      %p136 = por %p134, %p135
      %p137 = scmp.ne.s32.totalorder %s129, %s132
      %p138 = scmp.eq.s32.totalorder %s16, 0
      %p139 = por %p137, %p138
      %p140 = scmp.ne.s32.totalorder %s129, %s132
      %p141 = scmp.eq.s32.totalorder %s21, 1
      %p142 = por %p140, %p141
      %p143 = scmp.ne.s32.totalorder %s132, %s133
      %p144 = scmp.eq.s32.totalorder %s21, 0
      %p145 = por %p143, %p144
      %p146 = scmp.ne.s32.totalorder %s132, %s133
      %p147 = scmp.eq.s32.totalorder %s22, 1
      %p148 = por %p146, %p147
      %p150 = scmp.ne.s32.totalorder %s133, %s149
      %p151 = scmp.eq.s32.totalorder %s22, 0
      %p152 = por %p150, %p151
      %p153 = scmp.le.s32.totalorder 1, %s16
      %p154 = scmp.lt.s32.totalorder %s16, 3
      %p155 = pnand %p153, %p154
      %p156 = pneg %p155
      // Predicated region
      $region9: #{tpu_custom_call.1} parent=5 // pred_check
        _
      $region10: #{tpu_custom_call.1} parent=5 // pred_check_branch
        %158 = sbr.rel (%p155) target = $region12
      $region11: #{tpu_custom_call.1} parent=5 // pred_region
        %s159 = ssub.s32 %s16, 1
        // Predicated region
        $region13: #{tpu_custom_call.1} parent=11 // pred_check
          %p160 = pneg %p117
        $region14: #{tpu_custom_call.1} parent=11 // pred_check_branch
          %162 = sbr.rel (%p160) target = $region16
        $region15: #{tpu_custom_call.1} parent=11 // pred_region
          %p163 = scmp.lt.s32.totalorder %s27, 0
          %s164 = scalar_select %p163, %s27, 0
          %s165 = scalar_lea.vmem %s2, %s164
        $region16: #{tpu_custom_call.1} parent=11 // pred_fallthru
          _
      $region12: #{tpu_custom_call.1} parent=5 // pred_fallthru
        _
      %p166 = scmp.lt.s32.totalorder %s16, 2
      // Predicated region
      $region17: #{tpu_custom_call.1} parent=5 // pred_check
        %p167 = pneg %p166
      $region18: #{tpu_custom_call.1} parent=5 // pred_check_branch
        %169 = sbr.rel (%p167) target = $region20
      $region19: #{tpu_custom_call.1} parent=5 // pred_region
        // Predicated region
        $region21: #{tpu_custom_call.1} parent=19 // pred_check
          %p170 = pneg %p57
        $region22: #{tpu_custom_call.1} parent=19 // pred_check_branch
          %172 = sbr.rel (%p170) target = $region24
        $region23: #{tpu_custom_call.1} parent=19 // pred_region
          %s173 = sand.u32 %s47, 1
          %s174 = scalar_lea.sflag [#allocation3], %s173
          %s175 = sand.u32 %s47, 1
          %s176 = smul.addr %s175, 32
          %s177 = scalar_lea.vmem [#allocation2], %s176
          %s178 = smul.u32 8, %s23
          %s180 = ssub.s32 512, 512
          %181 = vsyncadd %s174, %s180
          %s182 = smul.addr %s178, 2
          %s183 = sadd.s32 %s25, %s182
          %s184 = smul.addr %s183, 64
          %s185 = scalar_lea.hbm %s0, %s184
          %s186 = sshll.u32 %s177, 4
          %s187 = int_to_ptr.vmem [resolvable:$true] %s186
          %192 = dma.hbm_to_vmem [thread:$0]  %s185, 512, %s187, %s174, 128, 64, 4
        $region24: #{tpu_custom_call.1} parent=19 // pred_fallthru
          _
        // Predicated region
        $region25: #{tpu_custom_call.1} parent=19 // pred_check
          %p193 = pneg %p85
        $region26: #{tpu_custom_call.1} parent=19 // pred_check_branch
          %195 = sbr.rel (%p193) target = $region28
        $region27: #{tpu_custom_call.1} parent=19 // pred_region
          %s196 = sand.u32 %s75, 1
          %s197 = scalar_lea.sflag [#allocation6], %s196
          %s198 = sand.u32 %s75, 1
          %s199 = smul.addr %s198, 64
          %s200 = scalar_lea.vmem [#allocation5], %s199
          %s201 = smul.u32 16, %s25
          %s203 = ssub.s32 1024, 1024
          %204 = vsyncadd %s197, %s203
          %s205 = sadd.s32 %s24, %s201
          %s206 = smul.addr %s205, 64
          %s207 = scalar_lea.hbm %s1, %s206
          %s208 = sshll.u32 %s200, 4
          %s209 = int_to_ptr.vmem [resolvable:$true] %s208
          %214 = dma.hbm_to_vmem [thread:$0]  %s207, 1024, %s209, %s197, 64, 64, 4
        $region28: #{tpu_custom_call.1} parent=19 // pred_fallthru
          _
      $region20: #{tpu_custom_call.1} parent=5 // pred_fallthru
        _
      %p215 = scmp.le.s32.totalorder 1, %s16
      %p216 = scmp.lt.s32.totalorder %s16, 3
      %p217 = pnand %p215, %p216
      %p218 = pneg %p217
      // Predicated region
      $region29: #{tpu_custom_call.1} parent=5 // pred_check
        _
      $region30: #{tpu_custom_call.1} parent=5 // pred_check_branch
        %220 = sbr.rel (%p217) target = $region32
      $region31: #{tpu_custom_call.1} parent=5 // pred_region
        %s221 = ssub.s32 %s16, 1
        %s222 = sand.u32 %s50, 1
        %s223 = scalar_lea.sflag [#allocation3], %s222
        %s224 = sand.u32 %s50, 1
        %s225 = smul.addr %s224, 32
        %s226 = scalar_lea.vmem [#allocation2], %s225
        // Predicated region
        $region33: #{tpu_custom_call.1} parent=31 // pred_check
          %p227 = pneg %p63
        $region34: #{tpu_custom_call.1} parent=31 // pred_check_branch
          %229 = sbr.rel (%p227) target = $region36
        $region35: #{tpu_custom_call.1} parent=31 // pred_region
          %230 = dma.done %s223, 512
        $region36: #{tpu_custom_call.1} parent=31 // pred_fallthru
          _
        %s231 = sand.u32 %s78, 1
        %s232 = scalar_lea.sflag [#allocation6], %s231
        %s233 = sand.u32 %s78, 1
        %s234 = smul.addr %s233, 64
        %s235 = scalar_lea.vmem [#allocation5], %s234
        // Predicated region
        $region37: #{tpu_custom_call.1} parent=31 // pred_check
          %p236 = pneg %p91
        $region38: #{tpu_custom_call.1} parent=31 // pred_check_branch
          %238 = sbr.rel (%p236) target = $region40
        $region39: #{tpu_custom_call.1} parent=31 // pred_region
          %239 = dma.done %s232, 1024
        $region40: #{tpu_custom_call.1} parent=31 // pred_fallthru
          _
        %s240 = sand.u32 %s50, 1
        %s241 = scalar_lea.sflag [#allocation3], %s240
        %s242 = sand.u32 %s50, 1
        %s243 = smul.addr %s242, 32
        %s244 = scalar_lea.vmem [#allocation2], %s243
        %p245 = pneg %p63
        %p246 = pneg %p60
        %s247 = sand.u32 %s78, 1
        %s248 = scalar_lea.sflag [#allocation6], %s247
        %s249 = sand.u32 %s78, 1
        %s250 = smul.addr %s249, 64
        %s251 = scalar_lea.vmem [#allocation5], %s250
        %p252 = pneg %p91
        %p253 = pneg %p88
        %p254 = scmp.lt.s32.totalorder %s27, 0
        %s255 = scalar_select %p254, %s27, 0
        %s256 = scalar_lea.vmem %s2, %s255
        %p257 = pneg %p117
        %p258 = pneg %p114
        %p259 = pneg %p145
        %p260 = pneg %p142
        %s261 = smul.u32 8, %s26
        %s262 = smul.u32 16, %s28
        %p263 = scmp.lt.s32.totalorder %s27, 0
        %s264 = scalar_select %p263, %s27, 0
        %s265 = scalar_lea.vmem %s2, %s264
        %s266 = smul.u32 8, %s26
        %p268 = scmp.eq.s32.totalorder %s28, 0
        // Predicated region
        $region41: #{tpu_custom_call.1} parent=31 // pred_check
          %p269 = pneg %p268
        $region42: #{tpu_custom_call.1} parent=31 // pred_check_branch
          %271 = sbr.rel (%p269) target = $region44
        $region43: #{tpu_custom_call.1} parent=31 // pred_region
          %272 = vst [vmem:[#allocation7] sm:$0xff] 0.0
          %273 = vst [vmem:[#allocation7 + $0x8] sm:$0xff] 0.0
          %274 = vst [vmem:[#allocation7 + $0x10] sm:$0xff] 0.0
          %275 = vst [vmem:[#allocation7 + $0x18] sm:$0xff] 0.0
          %276 = vst [vmem:[#allocation7 + $0x20] sm:$0xff] 0.0
          %277 = vst [vmem:[#allocation7 + $0x28] sm:$0xff] 0.0
          %278 = vst [vmem:[#allocation7 + $0x30] sm:$0xff] 0.0
          %279 = vst [vmem:[#allocation7 + $0x38] sm:$0xff] 0.0
        $region44: #{tpu_custom_call.1} parent=31 // pred_fallthru
          _
        %v280 = vld [vmem:[#allocation7] sm:$0xff]
        %v281 = vld [vmem:[#allocation7 + $0x8] sm:$0xff]
        %v282 = vld [vmem:[#allocation7 + $0x10] sm:$0xff]
        %v283 = vld [vmem:[#allocation7 + $0x18] sm:$0xff]
        %v284 = vld [vmem:[#allocation7 + $0x20] sm:$0xff]
        %v285 = vld [vmem:[#allocation7 + $0x28] sm:$0xff]
        %v286 = vld [vmem:[#allocation7 + $0x30] sm:$0xff]
        %v287 = vld [vmem:[#allocation7 + $0x38] sm:$0xff]
        %v288 = vld [vmem:[%s226] sm:$0xf]
        %v289 = vld [vmem:[%s226 + $0x4] sm:$0xf]
        %v290 = vld [vmem:[%s226 + $0x8] sm:$0xf]
        %v291 = vld [vmem:[%s226 + $0xc] sm:$0xf]
        %v292 = vld [vmem:[%s226 + $0x10] sm:$0xf]
        %v293 = vld [vmem:[%s226 + $0x14] sm:$0xf]
        %v294 = vld [vmem:[%s226 + $0x18] sm:$0xf]
        %v295 = vld [vmem:[%s226 + $0x1c] sm:$0xf]
        %v296 = vld [vmem:[%s235] sm:$0xf]
        %v297 = vld [vmem:[%s235 + $0x4] sm:$0xf]
        %v298 = vld [vmem:[%s235 + $0x8] sm:$0xf]
        %v299 = vld [vmem:[%s235 + $0xc] sm:$0xf]
        %v300 = vld [vmem:[%s235 + $0x10] sm:$0xf]
        %v301 = vld [vmem:[%s235 + $0x14] sm:$0xf]
        %v302 = vld [vmem:[%s235 + $0x18] sm:$0xf]
        %v303 = vld [vmem:[%s235 + $0x1c] sm:$0xf]
        %v304 = vld [vmem:[%s235 + $0x20] sm:$0xf]
        %v305 = vld [vmem:[%s235 + $0x24] sm:$0xf]
        %v306 = vld [vmem:[%s235 + $0x28] sm:$0xf]
        %v307 = vld [vmem:[%s235 + $0x2c] sm:$0xf]
        %v308 = vld [vmem:[%s235 + $0x30] sm:$0xf]
        %v309 = vld [vmem:[%s235 + $0x34] sm:$0xf]
        %v310 = vld [vmem:[%s235 + $0x38] sm:$0xf]
        %v311 = vld [vmem:[%s235 + $0x3c] sm:$0xf]
        %v320 = vunpack.c.l.b16 %v288
        %v321 = vunpack.c.l.b16 %v289
        %v322 = vunpack.c.l.b16 %v290
        %v323 = vunpack.c.l.b16 %v291
        %v324 = vunpack.c.l.b16 %v292
        %v325 = vunpack.c.l.b16 %v293
        %v326 = vunpack.c.l.b16 %v294
        %v327 = vunpack.c.l.b16 %v295
        %v328 = vpack.c.b16 %v321, %v320
        %v329 = vpack.c.b16 %v323, %v322
        %v330 = vpack.c.b16 %v325, %v324
        %v331 = vpack.c.b16 %v327, %v326
        %v352 = vunpack.c.l.b16 %v296
        %v353 = vunpack.c.l.b16 %v297
        %v354 = vunpack.c.l.b16 %v298
        %v355 = vunpack.c.l.b16 %v299
        %v356 = vunpack.c.l.b16 %v300
        %v357 = vunpack.c.l.b16 %v301
        %v358 = vunpack.c.l.b16 %v302
        %v359 = vunpack.c.l.b16 %v303
        %v360 = vunpack.c.l.b16 %v304
        %v361 = vunpack.c.l.b16 %v305
        %v362 = vunpack.c.l.b16 %v306
        %v363 = vunpack.c.l.b16 %v307
        %v364 = vunpack.c.l.b16 %v308
        %v365 = vunpack.c.l.b16 %v309
        %v366 = vunpack.c.l.b16 %v310
        %v367 = vunpack.c.l.b16 %v311
        %v368 = vpack.c.b16 %v353, %v352
        %v369 = vpack.c.b16 %v355, %v354
        %v370 = vpack.c.b16 %v357, %v356
        %v371 = vpack.c.b16 %v359, %v358
        %v372 = vpack.c.b16 %v361, %v360
        %v373 = vpack.c.b16 %v363, %v362
        %v374 = vpack.c.b16 %v365, %v364
        %v375 = vpack.c.b16 %v367, %v366
        %384 = vmatprep.subr.bf16.mxu0 0
        %385 = vmatpush1.bf16.msra.mxu0 %v375
        %386 = vmatprep.subr.bf16.mxu0 0
        %387 = vmatpush1.bf16.msra.mxu0 %v374
        %388 = vmatprep.subr.bf16.mxu0 0
        %389 = vmatpush1.bf16.msra.mxu0 %v373
        %390 = vmatprep.subr.bf16.mxu0 0
        %391 = vmatpush1.bf16.msra.mxu0 %v372
        %392 = vmatprep.subr.bf16.mxu0 0
        %393 = vmatpush1.bf16.msra.mxu0 %v371
        %394 = vmatprep.subr.bf16.mxu0 0
        %395 = vmatpush1.bf16.msra.mxu0 %v370
        %396 = vmatprep.subr.bf16.mxu0 0
        %397 = vmatpush1.bf16.msra.mxu0 %v369
        %398 = vmatprep.subr.bf16.mxu0 0
        %399 = vmatpush1.bf16.msra.mxu0 %v368
        %400 = vmatprep.subr.bf16.mxu0 0
        %401 = vmatpush2.bf16.msra.mxu0 0
        %402 = vmatprep.subr.bf16.mxu0 0
        %403 = vmatpush2.bf16.msra.mxu0 0
        %404 = vmatprep.subr.bf16.mxu0 0
        %405 = vmatpush2.bf16.msra.mxu0 0
        %406 = vmatprep.subr.bf16.mxu0 0
        %407 = vmatpush2.bf16.msra.mxu0 0
        %408 = vmatprep.subr.bf16.mxu0 0
        %409 = vmatpush2.bf16.msra.mxu0 0
        %410 = vmatprep.subr.bf16.mxu0 0
        %411 = vmatpush2.bf16.msra.mxu0 0
        %412 = vmatprep.subr.bf16.mxu0 0
        %413 = vmatpush2.bf16.msra.mxu0 0
        %414 = vmatprep.subr.bf16.mxu0 0
        %415 = vmatpush2.bf16.msra.mxu0 0
        %416 = vmatprep.mubr.bf16.mxu0 0
        %417 = vmatmul.mubr.bf16.gmra.mxu0 %v328
        %v418 = vpop.f32.mrf.mxu0
        %v419 = vadd.f32 0.0, %v418
        %v420 = vpop.f32.mrf.mxu0
        %v421 = vpop.f32.mrf.mxu0
        %v422 = vadd.f32 0.0, %v421
        %v423 = vpop.f32.mrf.mxu0
        %424 = vmatprep.mubr.bf16.mxu0 0
        %425 = vmatmul.mubr.bf16.gmra.mxu0 %v329
        %v426 = vpop.f32.mrf.mxu0
        %v427 = vadd.f32 0.0, %v426
        %v428 = vpop.f32.mrf.mxu0
        %v429 = vpop.f32.mrf.mxu0
        %v430 = vadd.f32 0.0, %v429
        %v431 = vpop.f32.mrf.mxu0
        %432 = vmatprep.mubr.bf16.mxu0 0
        %433 = vmatmul.mubr.bf16.gmra.mxu0 %v330
        %v434 = vpop.f32.mrf.mxu0
        %v435 = vadd.f32 0.0, %v434
        %v436 = vpop.f32.mrf.mxu0
        %v437 = vpop.f32.mrf.mxu0
        %v438 = vadd.f32 0.0, %v437
        %v439 = vpop.f32.mrf.mxu0
        %440 = vmatprep.mubr.bf16.mxu0 0
        %441 = vmatmul.mubr.bf16.gmra.mxu0 %v331
        %v442 = vpop.f32.mrf.mxu0
        %v443 = vadd.f32 0.0, %v442
        %v444 = vpop.f32.mrf.mxu0
        %v445 = vpop.f32.mrf.mxu0
        %v446 = vadd.f32 0.0, %v445
        %v447 = vpop.f32.mrf.mxu0
        %448 = vdwg.mxu0
        %v449 = vadd.f32 %v280, %v419
        %v450 = vadd.f32 %v281, %v422
        %v451 = vadd.f32 %v282, %v427
        %v452 = vadd.f32 %v283, %v430
        %v453 = vadd.f32 %v284, %v435
        %v454 = vadd.f32 %v285, %v438
        %v455 = vadd.f32 %v286, %v443
        %v456 = vadd.f32 %v287, %v446
        %457 = vst [vmem:[#allocation7] sm:$0xff] %v449
        %458 = vst [vmem:[#allocation7 + $0x8] sm:$0xff] %v450
        %459 = vst [vmem:[#allocation7 + $0x10] sm:$0xff] %v451
        %460 = vst [vmem:[#allocation7 + $0x18] sm:$0xff] %v452
        %461 = vst [vmem:[#allocation7 + $0x20] sm:$0xff] %v453
        %462 = vst [vmem:[#allocation7 + $0x28] sm:$0xff] %v454
        %463 = vst [vmem:[#allocation7 + $0x30] sm:$0xff] %v455
        %464 = vst [vmem:[#allocation7 + $0x38] sm:$0xff] %v456
        %p465 = scmp.eq.s32.totalorder %s28, 1
        // Predicated region
        $region45: #{tpu_custom_call.1} parent=31 // pred_check
          %p466 = pneg %p465
        $region46: #{tpu_custom_call.1} parent=31 // pred_check_branch
          %468 = sbr.rel (%p466) target = $region48
        $region47: #{tpu_custom_call.1} parent=31 // pred_region
          %v469 = vld [vmem:[#allocation7] sm:$0xff]
          %v470 = vld [vmem:[#allocation7 + $0x8] sm:$0xff]
          %v471 = vld [vmem:[#allocation7 + $0x10] sm:$0xff]
          %v472 = vld [vmem:[#allocation7 + $0x18] sm:$0xff]
          %v473 = vld [vmem:[#allocation7 + $0x20] sm:$0xff]
          %v474 = vld [vmem:[#allocation7 + $0x28] sm:$0xff]
          %v475 = vld [vmem:[#allocation7 + $0x30] sm:$0xff]
          %v476 = vld [vmem:[#allocation7 + $0x38] sm:$0xff]
          %v477 = vld [vmem:[%s265] sm:$0x1]
          %v479 = vlaneseq
          %v480 = vshrl.u32 %v479, 7
          %v481 = vsub.s32 0, %v480
          %v482 = vrot.slane %v477, %v481
          %v484 = vadd.f32 %v469, %v482
          %v485 = vadd.f32 %v470, %v482
          %v486 = vadd.f32 %v471, %v482
          %v487 = vadd.f32 %v472, %v482
          %v488 = vadd.f32 %v473, %v482
          %v489 = vadd.f32 %v474, %v482
          %v490 = vadd.f32 %v475, %v482
          %v491 = vadd.f32 %v476, %v482
          %492 = vst [vmem:[#allocation7] sm:$0xff] %v484
          %493 = vst [vmem:[#allocation7 + $0x8] sm:$0xff] %v485
          %494 = vst [vmem:[#allocation7 + $0x10] sm:$0xff] %v486
          %495 = vst [vmem:[#allocation7 + $0x18] sm:$0xff] %v487
          %496 = vst [vmem:[#allocation7 + $0x20] sm:$0xff] %v488
          %497 = vst [vmem:[#allocation7 + $0x28] sm:$0xff] %v489
          %498 = vst [vmem:[#allocation7 + $0x30] sm:$0xff] %v490
          %499 = vst [vmem:[#allocation7 + $0x38] sm:$0xff] %v491
        $region48: #{tpu_custom_call.1} parent=31 // pred_fallthru
          _
        // Predicated region
        $region49: #{tpu_custom_call.1} parent=31 // pred_check
          %p500 = pneg %p142
        $region50: #{tpu_custom_call.1} parent=31 // pred_check_branch
          %502 = sbr.rel (%p500) target = $region52
        $region51: #{tpu_custom_call.1} parent=31 // pred_region
          %s503 = smul.u32 8, %s26
          %s505 = ssub.s32 1024, 1024
          %506 = vsyncadd [#allocation4], %s505
          %s507 = sadd.s32 %s27, %s503
          %s508 = smul.addr %s507, 128
          %s509 = scalar_lea.hbm %s3, %s508
          %s510 = sshll.u32 [#allocation7], 4
          %s511 = int_to_ptr.vmem [resolvable:$true] %s510
          %516 = dma.vmem_to_hbm [thread:$0]  %s511, 1024, %s509, [#allocation4], 128, 128, 8
        $region52: #{tpu_custom_call.1} parent=31 // pred_fallthru
          _
        // Predicated region
        $region53: #{tpu_custom_call.1} parent=31 // pred_check
          %p517 = pneg %p142
        $region54: #{tpu_custom_call.1} parent=31 // pred_check_branch
          %519 = sbr.rel (%p517) target = $region56
        $region55: #{tpu_custom_call.1} parent=31 // pred_region
          %520 = dma.done [#allocation4], 1024
        $region56: #{tpu_custom_call.1} parent=31 // pred_fallthru
          _
      $region32: #{tpu_custom_call.1} parent=5 // pred_fallthru
        _
      %p521 = scmp.le.s32.totalorder 2, %s16
      // Predicated region
      $region57: #{tpu_custom_call.1} parent=5 // pred_check
        %p522 = pneg %p521
      $region58: #{tpu_custom_call.1} parent=5 // pred_check_branch
        %524 = sbr.rel (%p522) target = $region60
      $region59: #{tpu_custom_call.1} parent=5 // pred_region
        %s525 = ssub.s32 %s16, 2
      $region60: #{tpu_custom_call.1} parent=5 // pred_fallthru
        _
    $region6: #{tpu_custom_call.1} parent=1 // loop_footer
      %s20 = sadd.s32 1, %s16
    $region7: #{tpu_custom_call.1} parent=1 // loop_footer_branch
      %15 = sbr.rel target = $region3
    $region8: #{tpu_custom_call.1} parent=1 // loop_exit
      _
    %526 = vsyncpa [#allocation3], 1
    %s527 = scalar_lea.sflag [#allocation3], 1
    %528 = vsyncpa %s527, 1
    %529 = vsyncpa [#allocation6], 1
    %s530 = scalar_lea.sflag [#allocation6], 1
    %531 = vsyncpa %s530, 1
    %532 = vsyncpa [#allocation4], 1
    %s533 = scalar_lea.sflag [#allocation4], 1
    %534 = vsyncpa %s533, 1

</llo_original>
